<compile_context>
chip_gen: v5e
topology: v5e:2x2
jax: 0.10.0
libtpu: 0.0.40
codegen_flags: <defaults>
</compile_context>

<pallas_src>
import functools

import jax
import jax.numpy as jnp
from jax import lax
from jax.experimental import pallas as pl
from jax.experimental.pallas import tpu as pltpu

LANES = 128               # lane width (minor dim)
SUBLANES = 8              # f32 sublane tile
BLOCK_ROWS = 8192         # (8192, 128) f32 streaming block = 4 MiB / buffer
ACC_ROWS = 64             # pass-1 accumulator height (8 vregs per accumulator)
UNROLL = 8                # pass-1 inner unroll (ACC_ROWS * UNROLL = 512 rows)
FUSED_MAX_ROWS = 4096     # <= 2 MiB padded -> single fused kernel
VMEM_LIMIT = 32 * 1024 * 1024


def _round_up(a, b):
    return (a + b - 1) // b * b


def _cdiv(a, b):
    return (a + b - 1) // b


# ---------------------------------------------------------------------------
# Fused path (small tensors): min/max + quantize in one kernel, x stays in
# VMEM, mn/step written as (1, 1) outputs.
# ---------------------------------------------------------------------------
def _fused_kernel(x_ref, o_ref, mn_ref, step_ref, *, bits, size, needs_mask):
    x = x_ref[...]                                   # (rows_p, 128) f32
    if needs_mask:
        # Only taken when the (cheap, small) wrapper pad added elements; mask
        # is built once: full rows + one partial row.
        full_rows = size // LANES
        rem = size % LANES
        r = lax.broadcasted_iota(jnp.int32, x.shape, 0)
        l = lax.broadcasted_iota(jnp.int32, x.shape, 1)
        inb = (r < full_rows) | ((r == full_rows) & (l < rem))
        xmn = jnp.where(inb, x, jnp.inf)
        xmx = jnp.where(inb, x, -jnp.inf)
    else:
        xmn = x
        xmx = x
    # Two single-axis reductions (sublane then lane), kept 2-D throughout.
    mn = jnp.min(jnp.min(xmn, axis=0, keepdims=True), axis=1, keepdims=True)
    mx = jnp.max(jnp.max(xmx, axis=0, keepdims=True), axis=1, keepdims=True)
    step = (mx - mn) / float(2 ** bits - 1)
    inv = 1.0 / step
    c = -mn * inv - float(2 ** (bits - 1))
    o_ref[...] = jnp.round(x * inv[0, 0] + c[0, 0])
    mn_ref[...] = mn
    step_ref[...] = step


# ---------------------------------------------------------------------------
# Streaming pass 1: per-block partial min / max.
# Explicit unrolled loop over (ACC_ROWS, 128) chunks -> two (64, 128)
# accumulators (pure VPU elementwise min/max, ~20 live vregs), then a final
# VPU-only fold to an (8, 128) partial per grid block.
# ---------------------------------------------------------------------------
def _minmax_block_kernel(x_ref, pmin_ref, pmax_ref, *, n_outer):
    init = (jnp.full((ACC_ROWS, LANES), jnp.inf, dtype=jnp.float32),
            jnp.full((ACC_ROWS, LANES), -jnp.inf, dtype=jnp.float32))

    def body(o, carry):
        amn, amx = carry
        base = o * (ACC_ROWS * UNROLL)
        for u in range(UNROLL):                      # static unroll
            start = pl.multiple_of(base + u * ACC_ROWS, ACC_ROWS)
            v = x_ref[pl.ds(start, ACC_ROWS), :]     # (64, 128), one load
            amn = jnp.minimum(amn, v)
            amx = jnp.maximum(amx, v)
        return amn, amx

    amn, amx = lax.fori_loop(0, n_outer, body, init)
    # (64,128) -> (8,8,128) is a free regrouping of sublanes; reduce over the
    # leading axis is elementwise across 8 vregs (VPU only).
    pmin_ref[0] = jnp.min(amn.reshape(ACC_ROWS // SUBLANES, SUBLANES, LANES),
                          axis=0)
    pmax_ref[0] = jnp.max(amx.reshape(ACC_ROWS // SUBLANES, SUBLANES, LANES),
                          axis=0)


# ---------------------------------------------------------------------------
# Streaming pass 2: elementwise quantize  round(x * inv_step + c)
# with c = -mn*inv_step - 2**(bits-1) folded in the wrapper.
# ---------------------------------------------------------------------------
def _quant_kernel(inv_ref, c_ref, x_ref, o_ref):
    o_ref[...] = jnp.round(x_ref[...] * inv_ref[0, 0] + c_ref[0, 0])


@functools.partial(jax.jit, static_argnames=("bits",))
def quantization_layer(x, bits):
    orig_shape = x.shape
    out_dtype = x.dtype if jnp.issubdtype(x.dtype, jnp.floating) else jnp.float32
    # TODO(synk): bf16/fp16 inputs are upcast in the wrapper (extra HBM pass);
    # reading the native dtype and upcasting in-kernel would avoid it.
    x_flat = x.reshape(-1).astype(jnp.float32)
    size = x_flat.shape[0]
    levels = float(2 ** bits - 1)
    offset = float(2 ** (bits - 1))

    # ------------------------------------------------------------------ fused
    rows_p = _round_up(max(_cdiv(size, LANES), 1), SUBLANES)
    if rows_p <= FUSED_MAX_ROWS:
        padded = rows_p * LANES
        needs_mask = padded != size
        xin = jnp.pad(x_flat, (0, padded - size)) if needs_mask else x_flat
        x2d = xin.reshape(rows_p, LANES)
        q2d, mn11, step11 = pl.pallas_call(
            functools.partial(_fused_kernel, bits=bits, size=size,
                              needs_mask=needs_mask),
            out_shape=(jax.ShapeDtypeStruct((rows_p, LANES), jnp.float32),
                       jax.ShapeDtypeStruct((1, 1), jnp.float32),
                       jax.ShapeDtypeStruct((1, 1), jnp.float32)),
            grid=(1,),
            in_specs=[pl.BlockSpec((rows_p, LANES), lambda i: (0, 0))],
            out_specs=(pl.BlockSpec((rows_p, LANES), lambda i: (0, 0)),
                       pl.BlockSpec((1, 1), lambda i: (0, 0)),
                       pl.BlockSpec((1, 1), lambda i: (0, 0))),
            compiler_params=pltpu.CompilerParams(
                dimension_semantics=("arbitrary",),
                vmem_limit_bytes=VMEM_LIMIT),
            cost_estimate=pl.CostEstimate(
                flops=6 * size, transcendentals=0, bytes_accessed=8 * size),
        )(x2d)
        mn = mn11[0, 0]
        step = step11[0, 0]
        if needs_mask:
            q = q2d.reshape(-1)[:size].reshape(orig_shape)
        else:
            q = q2d.reshape(orig_shape)              # free reshape
        return q.astype(out_dtype), mn.astype(out_dtype), step.astype(out_dtype)

    # -------------------------------------------------------------- streaming
    rem = size % LANES
    bulk = size - rem
    rows = bulk // LANES                             # >= ~4090 on this path
    if rem:
        # TODO(synk): this slice materializes a copy of the bulk; a manual-DMA
        # (memory_space=pl.ANY) path would avoid it for non-128-multiple sizes.
        x2d = x_flat[:bulk].reshape(rows, LANES)
    else:
        x2d = x_flat.reshape(rows, LANES)            # free view

    # --- pass 1: partial min/max over fully in-bounds blocks only -----------
    step_rows = ACC_ROWS * UNROLL                    # 512
    blk1 = min(BLOCK_ROWS, (rows // step_rows) * step_rows)
    nblk1 = rows // blk1
    n_outer = blk1 // step_rows
    pmin, pmax = pl.pallas_call(
        functools.partial(_minmax_block_kernel, n_outer=n_outer),
        out_shape=(
            jax.ShapeDtypeStruct((nblk1, SUBLANES, LANES), jnp.float32),
            jax.ShapeDtypeStruct((nblk1, SUBLANES, LANES), jnp.float32),
        ),
        grid=(nblk1,),
        in_specs=[pl.BlockSpec((blk1, LANES), lambda i: (i, 0))],
        out_specs=(
            pl.BlockSpec((1, SUBLANES, LANES), lambda i: (i, 0, 0)),
            pl.BlockSpec((1, SUBLANES, LANES), lambda i: (i, 0, 0)),
        ),
        compiler_params=pltpu.CompilerParams(
            dimension_semantics=("parallel",),
            vmem_limit_bytes=VMEM_LIMIT),
        cost_estimate=pl.CostEstimate(
            flops=2 * nblk1 * blk1 * LANES, transcendentals=0,
            bytes_accessed=4 * nblk1 * blk1 * LANES
            + 2 * nblk1 * SUBLANES * LANES * 4),
    )(x2d)

    mn = jnp.min(pmin)
    mx = jnp.max(pmax)
    covered = nblk1 * blk1 * LANES
    if covered < size:                               # static; leftover < 4 MiB
        t = x_flat[covered:]
        mn = jnp.minimum(mn, jnp.min(t))
        mx = jnp.maximum(mx, jnp.max(t))

    step = (mx - mn) / levels
    inv_step = 1.0 / step
    c = -mn * inv_step - offset                      # folded constant

    # --- pass 2: elementwise quantize (ragged last block is harmless) -------
    blk2 = min(BLOCK_ROWS, rows)
    nblk2 = _cdiv(rows, blk2)
    q2d = pl.pallas_call(
        _quant_kernel,
        out_shape=jax.ShapeDtypeStruct((rows, LANES), jnp.float32),
        grid=(nblk2,),
        in_specs=[
            pl.BlockSpec(memory_space=pltpu.MemorySpace.SMEM),   # inv_step
            pl.BlockSpec(memory_space=pltpu.MemorySpace.SMEM),   # c
            pl.BlockSpec((blk2, LANES), lambda i: (i, 0)),
        ],
        out_specs=pl.BlockSpec((blk2, LANES), lambda i: (i, 0)),
        compiler_params=pltpu.CompilerParams(
            dimension_semantics=("parallel",),
            vmem_limit_bytes=VMEM_LIMIT),
        cost_estimate=pl.CostEstimate(
            flops=3 * rows * LANES, transcendentals=0,
            bytes_accessed=8 * rows * LANES),
    )(inv_step.reshape(1, 1), c.reshape(1, 1), x2d)

    if rem:
        q_tail = jnp.round(x_flat[bulk:] * inv_step + c)     # < 128 elements
        q = jnp.concatenate([q2d.reshape(-1), q_tail]).reshape(orig_shape)
    else:
        q = q2d.reshape(orig_shape)                  # free reshape
    return q.astype(out_dtype), mn.astype(out_dtype), step.astype(out_dtype)


if __name__ == "__main__":
    bits = 8
    key = jax.random.PRNGKey(0)
    # NCHW input, small shapes: batch=2, channels=4, spatial=16x16
    x = jax.random.normal(key, (2, 4, 16, 16), dtype=jnp.float32)

    q, mn, step = quantization_layer(x, bits=bits)
    jax.block_until_ready((q, mn, step))

    # Reference (spec formula) in plain JAX.
    mn_ref = jnp.min(x)
    mx_ref = jnp.max(x)
    step_ref = (mx_ref - mn_ref) / (2 ** bits - 1)
    q_ref = jnp.round((x - mn_ref) / step_ref) - 2 ** (bits - 1)

    assert q.shape == x.shape and q.dtype == jnp.float32
    assert jnp.allclose(mn, mn_ref, atol=1e-7)
    assert jnp.allclose(step, step_ref, atol=1e-7)
    # Kernel uses multiply-by-reciprocal with folded constants; allow (rare)
    # off-by-one at exact rounding-tie boundaries, require essentially all
    # elements exact.
    diff = jnp.abs(q - q_ref)
    assert float(jnp.max(diff)) <= 1.0 + 1e-5
    assert float(jnp.mean((diff <= 1e-5).astype(jnp.float32))) >= 0.99

    print("KERNEL_OK")
</pallas_src>

<mosaic_0001>
module attributes {stable_mosaic.version = 11 : i64} {
  func.func @_fused_kernel(%arg0: i32, %arg1: memref<16x128xf32, #tpu.memory_space<vmem>>, %arg2: memref<16x128xf32, #tpu.memory_space<vmem>>, %arg3: memref<1x1xf32, #tpu.memory_space<vmem>>, %arg4: memref<1x1xf32, #tpu.memory_space<vmem>>) attributes {dimension_semantics = [#tpu.dimension_semantics<arbitrary>], iteration_bounds = array<i64: 1>, scalar_prefetch = 0 : i64, scratch_operands = 0 : i64, tpu.core_type = #tpu.core_type<tc>, window_params = [{pipeline_mode = #tpu.pipeline_mode<synchronous>, transform_indices = @transform_0, window_bounds = array<i64: 16, 128>}, {pipeline_mode = #tpu.pipeline_mode<synchronous>, transform_indices = @transform_1, window_bounds = array<i64: 16, 128>}, {pipeline_mode = #tpu.pipeline_mode<synchronous>, transform_indices = @transform_2, window_bounds = array<i64: 1, 1>}, {pipeline_mode = #tpu.pipeline_mode<synchronous>, transform_indices = @transform_3, window_bounds = array<i64: 1, 1>}]} {
    %c0 = arith.constant 0 : index
    %c0_0 = arith.constant 0 : index
    %0 = vector.load %arg1[%c0, %c0_0] : memref<16x128xf32, #tpu.memory_space<vmem>>, vector<16x128xf32>
    %cst = arith.constant dense<0x7F800000> : vector<128xf32>
    %1 = vector.multi_reduction <minimumf>, %0, %cst [0] : vector<16x128xf32> to vector<128xf32>
    %2 = vector.shape_cast %1 : vector<128xf32> to vector<1x128xf32>
    %cst_1 = arith.constant dense<0x7F800000> : vector<1xf32>
    %3 = vector.multi_reduction <minimumf>, %2, %cst_1 [1] : vector<1x128xf32> to vector<1xf32>
    %4 = vector.shape_cast %3 : vector<1xf32> to vector<1x1xf32>
    %cst_2 = arith.constant dense<0xFF800000> : vector<128xf32>
    %5 = vector.multi_reduction <maximumf>, %0, %cst_2 [0] : vector<16x128xf32> to vector<128xf32>
    %6 = vector.shape_cast %5 : vector<128xf32> to vector<1x128xf32>
    %cst_3 = arith.constant dense<0xFF800000> : vector<1xf32>
    %7 = vector.multi_reduction <maximumf>, %6, %cst_3 [1] : vector<1x128xf32> to vector<1xf32>
    %8 = vector.shape_cast %7 : vector<1xf32> to vector<1x1xf32>
    %9 = arith.subf %8, %4 : vector<1x1xf32>
    %cst_4 = arith.constant 2.550000e+02 : f32
    %10 = vector.broadcast %cst_4 : f32 to vector<1x1xf32>
    %11 = arith.divf %9, %10 : vector<1x1xf32>
    %cst_5 = arith.constant 1.000000e+00 : f32
    %12 = vector.broadcast %cst_5 : f32 to vector<1x1xf32>
    %13 = arith.divf %12, %11 : vector<1x1xf32>
    %cst_6 = arith.constant 0.000000e+00 : f32
    %14 = vector.broadcast %cst_6 : f32 to vector<1x1xf32>
    %15 = arith.subf %14, %4 : vector<1x1xf32>
    %16 = arith.mulf %15, %13 : vector<1x1xf32>
    %cst_7 = arith.constant 1.280000e+02 : f32
    %17 = vector.broadcast %cst_7 : f32 to vector<1x1xf32>
    %18 = arith.subf %16, %17 : vector<1x1xf32>
    %19 = vector.extract %13[0, 0] : f32 from vector<1x1xf32>
    %20 = vector.broadcast %19 : f32 to vector<16x128xf32>
    %21 = arith.mulf %0, %20 : vector<16x128xf32>
    %22 = vector.extract %18[0, 0] : f32 from vector<1x1xf32>
    %23 = vector.broadcast %22 : f32 to vector<16x128xf32>
    %24 = arith.addf %21, %23 : vector<16x128xf32>
    %25 = math.roundeven %24 : vector<16x128xf32>
    %c0_8 = arith.constant 0 : index
    %c0_9 = arith.constant 0 : index
    %26 = vector.load %arg2[%c0_8, %c0_9] : memref<16x128xf32, #tpu.memory_space<vmem>>, vector<16x128xf32>
    tpu.vector_store %arg2[%c0_8, %c0_9], %25 {strides = array<i32>} : memref<16x128xf32, #tpu.memory_space<vmem>>, vector<16x128xf32>,
    %c0_10 = arith.constant 0 : index
    %c0_11 = arith.constant 0 : index
    %27 = vector.load %arg3[%c0_10, %c0_11] : memref<1x1xf32, #tpu.memory_space<vmem>>, vector<1x1xf32>
    tpu.vector_store %arg3[%c0_10, %c0_11], %4 {strides = array<i32>} : memref<1x1xf32, #tpu.memory_space<vmem>>, vector<1x1xf32>,
    %c0_12 = arith.constant 0 : index
    %c0_13 = arith.constant 0 : index
    %28 = vector.load %arg4[%c0_12, %c0_13] : memref<1x1xf32, #tpu.memory_space<vmem>>, vector<1x1xf32>
    tpu.vector_store %arg4[%c0_12, %c0_13], %11 {strides = array<i32>} : memref<1x1xf32, #tpu.memory_space<vmem>>, vector<1x1xf32>,
    return
  }
  func.func @transform_0(%arg0: i32) -> (i32, i32) {
    %c0_i32 = arith.constant 0 : i32
    %c0_i32_0 = arith.constant 0 : i32
    %c0_i32_1 = arith.constant 0 : i32
    return %c0_i32, %c0_i32_0 : i32, i32
  }
  func.func @transform_1(%arg0: i32) -> (i32, i32) {
    %c0_i32 = arith.constant 0 : i32
    %c0_i32_0 = arith.constant 0 : i32
    %c0_i32_1 = arith.constant 0 : i32
    return %c0_i32, %c0_i32_0 : i32, i32
  }
  func.func @transform_2(%arg0: i32) -> (i32, i32) {
    %c0_i32 = arith.constant 0 : i32
    %c0_i32_0 = arith.constant 0 : i32
    %c0_i32_1 = arith.constant 0 : i32
    return %c0_i32, %c0_i32_0 : i32, i32
  }
  func.func @transform_3(%arg0: i32) -> (i32, i32) {
    %c0_i32 = arith.constant 0 : i32
    %c0_i32_0 = arith.constant 0 : i32
    %c0_i32_1 = arith.constant 0 : i32
    return %c0_i32, %c0_i32_0 : i32, i32
  }
}

</mosaic_0001>

<llo_original>
// kernel: quantization_layer.1
$region0: #{quantization_layer.1}
  #allocation0 [shape = 'u32[]', space=smem, size = 0x4, offset = 0x4, fixed_abs, tag = 'smem constant byte address 0x4 - core index']
  #allocation1 [shape = 'u32[72,128]{1,0:T(1,128)}', space=vmem, size = 0x9000, scoped, tag = 'internal scratch']
  %s0 = inlined_call_operand.vmem [shape: f32[16,128], index: 0, kind: input, shape index: {}]
  %s1 = inlined_call_operand.vmem [shape: f32[16,128], index: 1, kind: output, shape index: {0}]
  %s2 = inlined_call_operand.hbm [shape: f32[1,1], index: 2, kind: output, shape index: {1}]
  %s3 = inlined_call_operand.hbm [shape: f32[1,1], index: 3, kind: output, shape index: {2}]
  %4 = xla_tuple %s1, %s2, %s3
  %s5 = sld [smem:[#allocation0]]
  $region30: #{quantization_layer.1} parent=0
    _
  %s7 = ssub.s32 1, %s5
  %s8 = scalar_select 0, %s7, %s5
  $region1: #{quantization_layer.1} parent=0
    #allocation2 [shape = 'u8[512]{0}', space=vmem, size = 0x400, scoped, tag = 'output window, operand 1, single buffered']
    #allocation3 [shape = 's32[1]{0}', space=sflag, size = 0x4, scoped, tag = 'scoped memory for quantization_layer.1']
    #allocation4 [shape = 'u8[512]{0}', space=vmem, size = 0x400, scoped, tag = 'output window, operand 2, single buffered']
    #allocation5 [shape = 's32[1]{0}', space=sflag, size = 0x4, scoped, tag = 'scoped memory for quantization_layer.1']
    %9 = vsyncpa [#allocation3], 0
    %10 = vsyncpa [#allocation5], 0
    // Predicated region
    $region2: #{quantization_layer.1} parent=1 // pred_check
      _
    $region3: #{quantization_layer.1} parent=1 // pred_check_branch
      %12 = sbr.rel (0) target = $region5
    $region4: #{quantization_layer.1} parent=1 // pred_region
      _
    $region5: #{quantization_layer.1} parent=1 // pred_fallthru
      _
    %v13 = vld [vmem:[%s0] sm:$0xff]
    %v14 = vld [vmem:[%s0 + $0x8] sm:$0xff]
    %v15 = vmin.f32 %v13, %v14
    %v16 = vrot.slane %v15, 4
    %v17 = vmin.f32 %v15, %v16
    %v18 = vrot.slane %v17, 2
    %v19 = vmin.f32 %v17, %v18
    %v20 = vrot.slane %v19, 1
    %v21 = vmin.f32 %v19, %v20
    %22 = vmin.xlane.f32.xlu0 %v21
    %v23 = vpop.xlane.xlu0 %22
    %v24 = vmax.f32 %v13, %v14
    %v25 = vrot.slane %v24, 4
    %v26 = vmax.f32 %v24, %v25
    %v27 = vrot.slane %v26, 2
    %v28 = vmax.f32 %v26, %v27
    %v29 = vrot.slane %v28, 1
    %v30 = vmax.f32 %v28, %v29
    %31 = vmax.xlane.f32.xlu0 %v30
    %v32 = vpop.xlane.xlu0 %31
    %v33 = vsub.f32 %v32, %v23
    %v34 = vrcp.pop 255.0
    %v35 = vmul.f32 255.0, %v34
    %v36 = vsub.f32 1.0, %v35
    %v37 = vmul.f32 %v34, %v36
    %v38 = vadd.f32 %v34, %v37
    %vm39 = vweird.f32 %v34
    %v40 = vsel %vm39, %v34, %v38
    %v41 = vmul.f32 %v33, %v40
    %v42 = vrcp.pop %v41
    %v43 = vmul.f32 %v41, %v42
    %v44 = vsub.f32 1.0, %v43
    %v45 = vmul.f32 %v42, %v44
    %v46 = vadd.f32 %v42, %v45
    %vm47 = vweird.f32 %v41
    %vm48 = vweird.f32 %v42
    %vm49 = vmor %vm47, %vm48
    %v50 = vsel %vm49, %v42, %v46
    %v51 = vand.u32 2147483647, %v41
    %vm52 = vcmp.eq.f32.partialorder %v51, 8.507059e+37
    %v53 = vand.u32 %v41, 2147483648
    %v54 = vor.u32 1.1754944e-38, %v53
    %v55 = vsel %vm52, %v54, %v50
    %v56 = vmul.f32 1.0, %v55
    %v57 = vsub.f32 0.0, %v23
    %v58 = vmul.f32 %v57, %v56
    %v59 = vsub.f32 %v58, 128.0
    %s60 = vtos %v56
    %v61 = vstv %s60
    %v62 = vmul.f32 %v13, %v61
    %v63 = vmul.f32 %v14, %v61
    %s64 = vtos %v59
    %v65 = vstv %s64
    %v66 = vadd.f32 %v62, %v65
    %v67 = vadd.f32 %v63, %v65
    %v68 = vround.ne.pseudo %v66
    %v69 = vround.ne.pseudo %v67
    %70 = vst [vmem:[%s1] sm:$0xff] %v68
    %71 = vst [vmem:[%s1 + $0x8] sm:$0xff] %v69
    %vm72 = vcmask 0
    %73 = vst.msk [vmem:[#allocation2] sm:$0x1] %vm72, %v23
    %74 = vst.msk [vmem:[#allocation4] sm:$0x1] %vm72, %v41
    // Predicated region
    $region6: #{quantization_layer.1} parent=1 // pred_check
      _
    $region7: #{quantization_layer.1} parent=1 // pred_check_branch
      %76 = sbr.rel (0) target = $region9
    $region8: #{quantization_layer.1} parent=1 // pred_region
      _
    $region9: #{quantization_layer.1} parent=1 // pred_fallthru
      _
    // Predicated region
    $region10: #{quantization_layer.1} parent=1 // pred_check
      _
    $region11: #{quantization_layer.1} parent=1 // pred_check_branch
      %78 = sbr.rel (0) target = $region13
    $region12: #{quantization_layer.1} parent=1 // pred_region
      %80 = vsyncadd [#allocation3], 0
      %s82 = sshll.u32 [#allocation2], 4
      %s83 = int_to_ptr.vmem [resolvable:$true] %s82
      %s84 = sshll.u32 %s2, 4
      %s85 = int_to_ptr.hbm [resolvable:$true] %s84
      %87 = dma.vmem_to_hbm [thread:$0]  %s83, 16, %s85, [#allocation3]
    $region13: #{quantization_layer.1} parent=1 // pred_fallthru
      _
    // Predicated region
    $region14: #{quantization_layer.1} parent=1 // pred_check
      _
    $region15: #{quantization_layer.1} parent=1 // pred_check_branch
      %89 = sbr.rel (0) target = $region17
    $region16: #{quantization_layer.1} parent=1 // pred_region
      %91 = vsyncadd [#allocation5], 0
      %s93 = sshll.u32 [#allocation4], 4
      %s94 = int_to_ptr.vmem [resolvable:$true] %s93
      %s95 = sshll.u32 %s3, 4
      %s96 = int_to_ptr.hbm [resolvable:$true] %s95
      %98 = dma.vmem_to_hbm [thread:$0]  %s94, 16, %s96, [#allocation5]
    $region17: #{quantization_layer.1} parent=1 // pred_fallthru
      _
    // Predicated region
    $region18: #{quantization_layer.1} parent=1 // pred_check
      _
    $region19: #{quantization_layer.1} parent=1 // pred_check_branch
      %100 = sbr.rel (0) target = $region21
    $region20: #{quantization_layer.1} parent=1 // pred_region
      _
    $region21: #{quantization_layer.1} parent=1 // pred_fallthru
      _
    // Predicated region
    $region22: #{quantization_layer.1} parent=1 // pred_check
      _
    $region23: #{quantization_layer.1} parent=1 // pred_check_branch
      %102 = sbr.rel (0) target = $region25
    $region24: #{quantization_layer.1} parent=1 // pred_region
      %104 = dma.done [#allocation3], 16
    $region25: #{quantization_layer.1} parent=1 // pred_fallthru
      _
    // Predicated region
    $region26: #{quantization_layer.1} parent=1 // pred_check
      _
    $region27: #{quantization_layer.1} parent=1 // pred_check_branch
      %106 = sbr.rel (0) target = $region29
    $region28: #{quantization_layer.1} parent=1 // pred_region
      %108 = dma.done [#allocation5], 16
    $region29: #{quantization_layer.1} parent=1 // pred_fallthru
      _
    %109 = vsyncpa [#allocation3], 1
    %110 = vsyncpa [#allocation5], 1

</llo_original>
